<compile_context>
chip_gen: v5e
topology: v5e:2x2
jax: 0.10.0
libtpu: 0.0.40
codegen_flags: <defaults>
</compile_context>

<pallas_src>
import functools

import jax
import jax.numpy as jnp
import numpy as np
from jax.experimental import pallas as pl
from jax.experimental.pallas import tpu as pltpu


_MASK_BIAS = -1e30   # additive bias on non-edges; exp underflows to exactly 0
_M_INIT = -1e9       # running-max init: far below any real logit, far above the mask value
                     # (avoids the fully-masked-block exp(0)=1 pitfall and the -inf NaN path)


def _round_up(v, m):
    return ((v + m - 1) // m) * m


# --------------------------------------------------------------------------- #
# Kernel 1: node-feature projection (+ fused per-node attention coefficients)  #
# --------------------------------------------------------------------------- #
def _proj_kernel(x_ref, w_ref, al_ref, ar_ref, h_ref, el_ref, er_ref):
    # h = x @ W^T  (lin projection, no bias). bf16 MXU inputs, f32 accumulation.
    h = jnp.dot(x_ref[...], w_ref[...], preferred_element_type=jnp.float32)   # [tN, H*C]
    h_lo = h.astype(h_ref.dtype)
    h_ref[...] = h_lo
    # e{l,r}[n, h] = sum_c feat[n, h, c] * attn_{l,r}[h, c] via block-diagonal matmuls (MXU),
    # replacing 2*H cross-lane reductions in the attention kernel.
    el_ref[...] = jnp.dot(h_lo, al_ref[...], preferred_element_type=jnp.float32)  # [tN, H]
    er_ref[...] = jnp.dot(h_lo, ar_ref[...], preferred_element_type=jnp.float32)  # [tN, H]


# --------------------------------------------------------------------------- #
# Kernel 2: masked edge softmax + weighted aggregation (online softmax over N) #
# --------------------------------------------------------------------------- #
def _gat_attn_kernel(el_ref, h_nbr_ref, er_t_ref, adj_ref, bias_ref,
                     out_ref, m_sc, l_sc, acc_sc,
                     *, num_heads, out_channels, negative_slope):
    H, C = num_heads, out_channels
    j = pl.program_id(1)
    last_j = pl.num_programs(1) - 1

    @pl.when(j == 0)
    def _init():
        m_sc[...] = jnp.full_like(m_sc, _M_INIT)
        l_sc[...] = jnp.zeros_like(l_sc)
        acc_sc[...] = jnp.zeros_like(acc_sc)

    h_nbr = h_nbr_ref[...]                                            # [tN, H*C] bf16
    er_t = er_t_ref[...]                                              # [H, tN]   f32
    el = el_ref[...]                                                  # [tT, H]   f32

    # Additive edge mask, computed once per tile and shared across heads.
    mask_bias = jnp.where(adj_ref[...] > 0.5,
                          jnp.float32(0.0), jnp.float32(_MASK_BIAS))  # [tT, tN]

    # TODO(synk): for large H move heads onto a grid axis / lax.fori_loop to bound
    #             vreg live ranges; static unroll is fine for small H.
    for hd in range(H):
        # spadd_gat: logits[i, n] = el[i, hd] + er[n, hd]   (broadcast add on the VPU)
        logits = el[:, hd:hd + 1] + er_t[hd:hd + 1, :]                # [tT, tN]
        # leaky relu, then mask (non-edges -> ~-1e30; their exp underflows to 0)
        logits = jnp.where(logits >= 0, logits, negative_slope * logits)
        logits = logits + mask_bias

        m_prev = m_sc[hd]                                             # [tT, 1]
        m_new = jnp.maximum(m_prev, jnp.max(logits, axis=1, keepdims=True))
        scale = jnp.exp(m_prev - m_new)                               # online-softmax rescale
        p = jnp.exp(logits - m_new)                                   # masked entries == 0

        l_sc[hd] = scale * l_sc[hd] + jnp.sum(p, axis=1, keepdims=True)
        fh = h_nbr[:, hd * C:(hd + 1) * C]                            # [tN, C] bf16
        acc_sc[:, hd * C:(hd + 1) * C] = (
            scale * acc_sc[:, hd * C:(hd + 1) * C]
            + jnp.dot(p.astype(fh.dtype), fh, preferred_element_type=jnp.float32))
        m_sc[hd] = m_new

    @pl.when(j == last_j)
    def _finalize():
        # Deferred normalization: one EUP reciprocal per head instead of [tT,tN] divides,
        # then ONE lane-dense store of the whole output tile.
        parts = []
        for hd in range(H):
            # max() guards padded / empty rows (denom would be 0, acc is 0 anyway).
            inv_l = pl.reciprocal(jnp.maximum(l_sc[hd], 1e-9), approx=True)   # [tT, 1]
            parts.append(acc_sc[:, hd * C:(hd + 1) * C] * inv_l)
        res = jnp.concatenate(parts, axis=1) + bias_ref[...]           # [tT, H*C]
        out_ref[...] = res.astype(out_ref.dtype)


# --------------------------------------------------------------------------- #
# Host-side glue / wrapper                                                     #
# --------------------------------------------------------------------------- #
def _attn_block_diag(attn, num_heads, out_channels):
    """[H, C] -> [H*C, H] block-diagonal so (h @ A)[:, h] = sum_c feat[:, h, c] * attn[h, c]."""
    H, C = num_heads, out_channels
    eye = jnp.eye(H, dtype=attn.dtype)
    return (attn[:, :, None] * eye[:, None, :]).reshape(H * C, H)


def gat_conv_forward(x_neighboor, w_t, attn_l, attn_r, bias, adj_mask, *,
                     num_heads, out_channels, negative_slope=0.2,
                     block_t=128, block_n=512, block_proj=512,
                     mxu_dtype=jnp.bfloat16, mean_output=False,
                     vmem_limit_bytes=48 * 1024 * 1024):
    """GATConv forward. Targets are the first T rows of x_neighboor (wholegraph convention)."""
    N, f_in = x_neighboor.shape
    T = adj_mask.shape[0]
    H, C = num_heads, out_channels
    HC = H * C
    assert adj_mask.shape == (T, N)

    # Block sizes obeying the (8, 128) tiling rule; pad N / T instead of requiring
    # divisibility (padded rows are safe through the mask + empty-row denom guard).
    block_t = _round_up(max(8, min(block_t, _round_up(T, 8))), 8)
    block_n = _round_up(max(128, min(block_n, _round_up(N, 128))), 128)
    block_proj = _round_up(max(8, min(block_proj, _round_up(N, 8))), 8)

    T_pad = _round_up(T, block_t)
    N_pad = _round_up(N, int(np.lcm(block_n, block_proj)))

    # bf16 MXU inputs (f32 accumulation in-kernel); adjacency kept compact too.
    x_c = x_neighboor.astype(mxu_dtype)
    if N_pad != N:
        x_c = jnp.pad(x_c, ((0, N_pad - N), (0, 0)))
    w_c = w_t.astype(mxu_dtype)
    al_mat = _attn_block_diag(attn_l, H, C).astype(mxu_dtype)     # [H*C, H]
    ar_mat = _attn_block_diag(attn_r, H, C).astype(mxu_dtype)     # [H*C, H]
    adj_c = adj_mask.astype(mxu_dtype)                            # 0/1 exact in bf16
    if T_pad != T or N_pad != N:
        adj_c = jnp.pad(adj_c, ((0, T_pad - T), (0, N_pad - N)))
    bias_c = jnp.asarray(bias, jnp.float32).reshape(1, HC)

    # ---- kernel 1: h = x @ W^T  (+ el, er = h @ blockdiag(attn_{l,r})) ----
    h, el, er = pl.pallas_call(
        _proj_kernel,
        out_shape=(jax.ShapeDtypeStruct((N_pad, HC), mxu_dtype),
                   jax.ShapeDtypeStruct((N_pad, H), jnp.float32),
                   jax.ShapeDtypeStruct((N_pad, H), jnp.float32)),
        grid_spec=pltpu.PrefetchScalarGridSpec(
            num_scalar_prefetch=0,
            grid=(N_pad // block_proj,),
            in_specs=[pl.BlockSpec((block_proj, f_in), lambda n: (n, 0)),
                      pl.BlockSpec((f_in, HC), lambda n: (0, 0)),
                      pl.BlockSpec((HC, H), lambda n: (0, 0)),
                      pl.BlockSpec((HC, H), lambda n: (0, 0))],
            out_specs=[pl.BlockSpec((block_proj, HC), lambda n: (n, 0)),
                       pl.BlockSpec((block_proj, H), lambda n: (n, 0)),
                       pl.BlockSpec((block_proj, H), lambda n: (n, 0))]),
        compiler_params=pltpu.CompilerParams(
            dimension_semantics=("parallel",),
            vmem_limit_bytes=vmem_limit_bytes),
    )(x_c, w_c, al_mat, ar_mat)

    # Tiny XLA ops: transpose er so neighbors land on the lane axis in kernel 2
    # (avoids an in-kernel sublane->lane relayout per head per tile); slice/pad el
    # to the padded target count.
    er_t = jnp.transpose(er)                                      # [H, N_pad] f32
    el_tgt = el[:T]
    if T_pad != T:
        el_tgt = jnp.pad(el_tgt, ((0, T_pad - T), (0, 0)))        # [T_pad, H] f32

    # ---- kernel 2: masked edge softmax + weighted aggregation ----
    kern = functools.partial(_gat_attn_kernel, num_heads=H, out_channels=C,
                             negative_slope=negative_slope)
    out = pl.pallas_call(
        kern,
        out_shape=jax.ShapeDtypeStruct((T_pad, HC), jnp.float32),
        grid_spec=pltpu.PrefetchScalarGridSpec(
            num_scalar_prefetch=0,
            grid=(T_pad // block_t, N_pad // block_n),
            in_specs=[
                pl.BlockSpec((block_t, H), lambda i, j: (i, 0)),        # el (target rows)
                pl.BlockSpec((block_n, HC), lambda i, j: (j, 0)),       # h (neighbor rows)
                pl.BlockSpec((H, block_n), lambda i, j: (0, j)),        # er^T
                pl.BlockSpec((block_t, block_n), lambda i, j: (i, j)),  # adjacency tile
                pl.BlockSpec((1, HC), lambda i, j: (0, 0)),             # bias
            ],
            out_specs=pl.BlockSpec((block_t, HC), lambda i, j: (i, 0)),
            scratch_shapes=[
                pltpu.VMEM((H, block_t, 1), jnp.float32),   # running max
                pltpu.VMEM((H, block_t, 1), jnp.float32),   # running denom
                pltpu.VMEM((block_t, HC), jnp.float32),     # running weighted sum
            ]),
        compiler_params=pltpu.CompilerParams(
            dimension_semantics=("parallel", "arbitrary"),
            vmem_limit_bytes=vmem_limit_bytes),
    )(el_tgt, h, er_t, adj_c, bias_c)

    out = out[:T]
    if mean_output:
        out = out.reshape(T, H, C).mean(axis=1)
    return out


# --------------------------------------------------------------------------- #
# Pure numpy reference (per-edge CSR semantics)                                #
# --------------------------------------------------------------------------- #
def reference_forward(x, w_t, attn_l, attn_r, bias, row_ptr, col_ind, *,
                      num_heads, out_channels, negative_slope=0.2,
                      feat_round_dtype=None):
    H, C = num_heads, out_channels
    T = len(row_ptr) - 1
    h = np.asarray(x, np.float64) @ np.asarray(w_t, np.float64)          # [N, H*C]
    if feat_round_dtype is not None:
        # mimic the kernel storing projected features in bf16
        h = np.asarray(jnp.asarray(h, jnp.float32).astype(feat_round_dtype)
                       .astype(jnp.float32), np.float64)
    feat = h.reshape(-1, H, C)                                           # [N, H, C]
    el = (feat[:T] * np.asarray(attn_l, np.float64)[None]).sum(-1)       # [T, H]
    er = (feat * np.asarray(attn_r, np.float64)[None]).sum(-1)           # [N, H]
    out_rows = []
    for i in range(T):
        cs = col_ind[row_ptr[i]:row_ptr[i + 1]]
        logits = el[i][None, :] + er[cs]                                 # [deg, H]
        logits = np.where(logits >= 0, logits, negative_slope * logits)
        logits = logits - logits.max(axis=0, keepdims=True)
        e = np.exp(logits)
        alpha = e / e.sum(axis=0, keepdims=True)
        y = np.einsum("eh,ehc->hc", alpha, feat[cs])
        out_rows.append(y.reshape(-1))
    return np.stack(out_rows) + np.asarray(bias, np.float64).reshape(1, -1)


# --------------------------------------------------------------------------- #
# Self-contained test                                                          #
# --------------------------------------------------------------------------- #
if __name__ == "__main__":
    in_channels = 32
    out_channels = 16
    num_heads = 2
    negative_slope = 0.2
    T = 32      # target nodes (CSR rows)
    N = 256     # sampled nodes; first T rows are the targets themselves
    deg = 6

    # ---- synthetic CSR graph (distinct cols per row) + self loops ----
    rows, cols, col_ind = [], [], []
    row_ptr = [0]
    for i in range(T):
        cs = [T + (i * 7 + k * 13) % (N - T) for k in range(deg)] + [i]  # + self loop
        for c in cs:
            rows.append(i)
            cols.append(c)
        col_ind.extend(cs)
        row_ptr.append(row_ptr[-1] + len(cs))
    row_ptr = np.asarray(row_ptr, np.int32)
    col_ind = np.asarray(col_ind, np.int32)

    adj = np.zeros((T, N), dtype=np.float32)
    adj[np.asarray(rows), np.asarray(cols)] = 1.0
    adj_mask = jnp.asarray(adj)

    # ---- deterministic parameters (xavier-normal, gain=sqrt(2)) ----
    key = jax.random.PRNGKey(0)
    k_x, k_w, k_al, k_ar, k_b = jax.random.split(key, 5)
    gain = float(np.sqrt(2.0))

    def bf16_round(a):  # round to bf16 so the bf16-MXU kernel and the reference agree
        return jnp.asarray(a, jnp.float32).astype(jnp.bfloat16).astype(jnp.float32)

    x_neighboor = bf16_round(jax.random.normal(k_x, (N, in_channels)))

    fan_in, fan_out = in_channels, num_heads * out_channels
    std_w = gain * np.sqrt(2.0 / (fan_in + fan_out))
    w_t = bf16_round(std_w * jax.random.normal(k_w, (in_channels, num_heads * out_channels)))
    std_a = gain * np.sqrt(2.0 / (num_heads + out_channels))
    attn_l = bf16_round(std_a * jax.random.normal(k_al, (num_heads, out_channels)))
    attn_r = bf16_round(std_a * jax.random.normal(k_ar, (num_heads, out_channels)))
    bias = 0.1 * jax.random.normal(k_b, (num_heads * out_channels,), dtype=jnp.float32)

    # ---- run Pallas kernels (small tiles to exercise the 2x2 grid / online softmax) ----
    y = gat_conv_forward(x_neighboor, w_t, attn_l, attn_r, bias, adj_mask,
                         num_heads=num_heads, out_channels=out_channels,
                         negative_slope=negative_slope,
                         block_t=16, block_n=128, block_proj=128)
    y = jax.block_until_ready(y)

    # ---- verify against the per-edge CSR reference (bf16-aware, loose tol) ----
    y_ref = reference_forward(np.asarray(x_neighboor), np.asarray(w_t),
                              np.asarray(attn_l), np.asarray(attn_r),
                              np.asarray(bias), row_ptr, col_ind,
                              num_heads=num_heads, out_channels=out_channels,
                              negative_slope=negative_slope,
                              feat_round_dtype=jnp.bfloat16)
    np.testing.assert_allclose(np.asarray(y), y_ref.astype(np.float32),
                               rtol=5e-2, atol=5e-2)

    print("KERNEL_OK")
</pallas_src>

<mosaic_0001>
module attributes {stable_mosaic.version = 11 : i64} {
  func.func @_proj_kernel(%arg0: i32, %arg1: memref<128x32xbf16, #tpu.memory_space<vmem>>, %arg2: memref<32x32xbf16, #tpu.memory_space<vmem>>, %arg3: memref<32x2xbf16, #tpu.memory_space<vmem>>, %arg4: memref<32x2xbf16, #tpu.memory_space<vmem>>, %arg5: memref<128x32xbf16, #tpu.memory_space<vmem>>, %arg6: memref<128x2xf32, #tpu.memory_space<vmem>>, %arg7: memref<128x2xf32, #tpu.memory_space<vmem>>) attributes {dimension_semantics = [#tpu.dimension_semantics<parallel>], iteration_bounds = array<i64: 2>, scalar_prefetch = 0 : i64, scratch_operands = 0 : i64, tpu.core_type = #tpu.core_type<tc>, window_params = [{transform_indices = @transform_0, window_bounds = array<i64: 128, 32>}, {pipeline_mode = #tpu.pipeline_mode<synchronous>, transform_indices = @transform_1, window_bounds = array<i64: 32, 32>}, {pipeline_mode = #tpu.pipeline_mode<synchronous>, transform_indices = @transform_2, window_bounds = array<i64: 32, 2>}, {pipeline_mode = #tpu.pipeline_mode<synchronous>, transform_indices = @transform_3, window_bounds = array<i64: 32, 2>}, {transform_indices = @transform_4, window_bounds = array<i64: 128, 32>}, {transform_indices = @transform_5, window_bounds = array<i64: 128, 2>}, {transform_indices = @transform_6, window_bounds = array<i64: 128, 2>}]} {
    %c0 = arith.constant 0 : index
    %c0_0 = arith.constant 0 : index
    %0 = vector.load %arg1[%c0, %c0_0] : memref<128x32xbf16, #tpu.memory_space<vmem>>, vector<128x32xbf16>
    %c0_1 = arith.constant 0 : index
    %c0_2 = arith.constant 0 : index
    %1 = vector.load %arg2[%c0_1, %c0_2] : memref<32x32xbf16, #tpu.memory_space<vmem>>, vector<32x32xbf16>
    %cst = arith.constant dense<0.000000e+00> : vector<128x32xf32>
    %2 = tpu.matmul %0, %1, %cst {dimension_numbers = #tpu.dot_dimension_numbers<[1], [0], [0], [1], [0, 0, 1, 1], [], []>} : vector<128x32xbf16>, vector<32x32xbf16>, vector<128x32xf32> -> vector<128x32xf32>
    %3 = arith.truncf %2 : vector<128x32xf32> to vector<128x32xbf16>
    %c0_3 = arith.constant 0 : index
    %c0_4 = arith.constant 0 : index
    %4 = vector.load %arg5[%c0_3, %c0_4] : memref<128x32xbf16, #tpu.memory_space<vmem>>, vector<128x32xbf16>
    tpu.vector_store %arg5[%c0_3, %c0_4], %3 {strides = array<i32>} : memref<128x32xbf16, #tpu.memory_space<vmem>>, vector<128x32xbf16>,
    %c0_5 = arith.constant 0 : index
    %c0_6 = arith.constant 0 : index
    %5 = vector.load %arg3[%c0_5, %c0_6] : memref<32x2xbf16, #tpu.memory_space<vmem>>, vector<32x2xbf16>
    %cst_7 = arith.constant dense<0.000000e+00> : vector<128x2xf32>
    %6 = tpu.matmul %3, %5, %cst_7 {dimension_numbers = #tpu.dot_dimension_numbers<[1], [0], [0], [1], [0, 0, 1, 1], [], []>} : vector<128x32xbf16>, vector<32x2xbf16>, vector<128x2xf32> -> vector<128x2xf32>
    %c0_8 = arith.constant 0 : index
    %c0_9 = arith.constant 0 : index
    %7 = vector.load %arg6[%c0_8, %c0_9] : memref<128x2xf32, #tpu.memory_space<vmem>>, vector<128x2xf32>
    tpu.vector_store %arg6[%c0_8, %c0_9], %6 {strides = array<i32>} : memref<128x2xf32, #tpu.memory_space<vmem>>, vector<128x2xf32>,
    %c0_10 = arith.constant 0 : index
    %c0_11 = arith.constant 0 : index
    %8 = vector.load %arg4[%c0_10, %c0_11] : memref<32x2xbf16, #tpu.memory_space<vmem>>, vector<32x2xbf16>
    %cst_12 = arith.constant dense<0.000000e+00> : vector<128x2xf32>
    %9 = tpu.matmul %3, %8, %cst_12 {dimension_numbers = #tpu.dot_dimension_numbers<[1], [0], [0], [1], [0, 0, 1, 1], [], []>} : vector<128x32xbf16>, vector<32x2xbf16>, vector<128x2xf32> -> vector<128x2xf32>
    %c0_13 = arith.constant 0 : index
    %c0_14 = arith.constant 0 : index
    %10 = vector.load %arg7[%c0_13, %c0_14] : memref<128x2xf32, #tpu.memory_space<vmem>>, vector<128x2xf32>
    tpu.vector_store %arg7[%c0_13, %c0_14], %9 {strides = array<i32>} : memref<128x2xf32, #tpu.memory_space<vmem>>, vector<128x2xf32>,
    return
  }
  func.func @transform_0(%arg0: i32) -> (i32, i32) {
    %c0_i32 = arith.constant 0 : i32
    %c0_i32_0 = arith.constant 0 : i32
    return %arg0, %c0_i32 : i32, i32
  }
  func.func @transform_1(%arg0: i32) -> (i32, i32) {
    %c0_i32 = arith.constant 0 : i32
    %c0_i32_0 = arith.constant 0 : i32
    %c0_i32_1 = arith.constant 0 : i32
    return %c0_i32, %c0_i32_0 : i32, i32
  }
  func.func @transform_2(%arg0: i32) -> (i32, i32) {
    %c0_i32 = arith.constant 0 : i32
    %c0_i32_0 = arith.constant 0 : i32
    %c0_i32_1 = arith.constant 0 : i32
    return %c0_i32, %c0_i32_0 : i32, i32
  }
  func.func @transform_3(%arg0: i32) -> (i32, i32) {
    %c0_i32 = arith.constant 0 : i32
    %c0_i32_0 = arith.constant 0 : i32
    %c0_i32_1 = arith.constant 0 : i32
    return %c0_i32, %c0_i32_0 : i32, i32
  }
  func.func @transform_4(%arg0: i32) -> (i32, i32) {
    %c0_i32 = arith.constant 0 : i32
    %c0_i32_0 = arith.constant 0 : i32
    return %arg0, %c0_i32 : i32, i32
  }
  func.func @transform_5(%arg0: i32) -> (i32, i32) {
    %c0_i32 = arith.constant 0 : i32
    %c0_i32_0 = arith.constant 0 : i32
    return %arg0, %c0_i32 : i32, i32
  }
  func.func @transform_6(%arg0: i32) -> (i32, i32) {
    %c0_i32 = arith.constant 0 : i32
    %c0_i32_0 = arith.constant 0 : i32
    return %arg0, %c0_i32 : i32, i32
  }
}

</mosaic_0001>

<llo_original>
// kernel: tpu_custom_call.1
$region0: #{tpu_custom_call.1}
  #allocation0 [shape = 'u32[]', space=smem, size = 0x4, offset = 0x4, fixed_abs, tag = 'smem constant byte address 0x4 - core index']
  #allocation1 [shape = 'u32[72,128]{1,0:T(1,128)}', space=vmem, size = 0x9000, scoped, tag = 'internal scratch']
  %s0 = inlined_call_operand.vmem [shape: bf16[256,32], index: 0, kind: input, shape index: {}]
  %s1 = inlined_call_operand.vmem [shape: bf16[32,32], index: 1, kind: input, shape index: {}]
  %s2 = inlined_call_operand.vmem [shape: bf16[32,2], index: 2, kind: input, shape index: {}]
  %s3 = inlined_call_operand.vmem [shape: bf16[32,2], index: 3, kind: input, shape index: {}]
  %s4 = inlined_call_operand.vmem [shape: bf16[256,32], index: 4, kind: output, shape index: {0}]
  %s5 = inlined_call_operand.vmem [shape: f32[256,2], index: 5, kind: output, shape index: {1}]
  %s6 = inlined_call_operand.vmem [shape: f32[256,2], index: 6, kind: output, shape index: {2}]
  %7 = xla_tuple %s4, %s5, %s6
  %s8 = sld [smem:[#allocation0]]
  $region65: #{tpu_custom_call.1} parent=0
    _
  %s10 = ssub.s32 1, %s8
  %s11 = scalar_select 0, %s10, %s8
  loop: start=0, step=1, limit=4
  $region2: #{tpu_custom_call.1} parent=0 // loop_pre_header
    _
  $region3: #{tpu_custom_call.1} parent=0 // loop_header
    %s13 = sphi 0, %s17
    %p14 = scmp.ge.s32.totalorder %s13, 4
    %s23 = sphi 0, %s25
    %s26 = sphi 0, %s23
    %s27 = sphi 0, %s26
    %s43 = sphi 0, %s27
    %s47 = sphi 0, %s47
    %s49 = sphi 0, %s47
    %s50 = sphi 0, %s49
    %s64 = sphi 0, %s50
    %s68 = sphi 0, %s68
    %s70 = sphi 0, %s68
    %s71 = sphi 0, %s70
    %s85 = sphi 0, %s71
    %s89 = sphi 0, %s89
    %s91 = sphi 0, %s89
    %s92 = sphi 0, %s91
    %s106 = sphi 0, %s92
    %s112 = sphi 0, %s114
    %s115 = sphi 0, %s112
    %s116 = sphi 0, %s115
    %s132 = sphi 0, %s116
    %s138 = sphi 0, %s140
    %s141 = sphi 0, %s138
    %s142 = sphi 0, %s141
    %s158 = sphi 0, %s142
    %s164 = sphi 0, %s166
    %s167 = sphi 0, %s164
    %s168 = sphi 0, %s167
    %s184 = sphi 0, %s168
  $region4: #{tpu_custom_call.1} parent=0 // loop_header_branch
    %16 = sbr.rel (%p14) target = $region8
  $region5: #{tpu_custom_call.1} parent=0 // loop_body
    %s18 = ssub.s32 %s13, 1
    %s19 = ssub.s32 %s13, 2
    %s20 = sadd.s32 %s13, 1
    %s21 = ssub.s32 %s13, %s20
    %p22 = scmp.eq.s32.totalorder %s21, 0
    %s24 = sadd.s32 %s23, 1
    %s25 = scalar_select %p22, %s23, %s24
    %p28 = pneg %p22
    %p29 = scmp.eq.s32.totalorder %s13, 1
    %p30 = por %p28, %p29
    %p31 = scmp.ne.s32.totalorder %s23, %s26
    %p32 = scmp.eq.s32.totalorder %s13, 0
    %p33 = por %p31, %p32
    %p34 = scmp.ne.s32.totalorder %s23, %s26
    %p35 = scmp.eq.s32.totalorder %s18, 1
    %p36 = por %p34, %p35
    %p37 = scmp.ne.s32.totalorder %s26, %s27
    %p38 = scmp.eq.s32.totalorder %s18, 0
    %p39 = por %p37, %p38
    %p40 = scmp.ne.s32.totalorder %s26, %s27
    %p41 = scmp.eq.s32.totalorder %s19, 1
    %p42 = por %p40, %p41
    %p44 = scmp.ne.s32.totalorder %s27, %s43
    %p45 = scmp.eq.s32.totalorder %s19, 0
    %p46 = por %p44, %p45
    %s48 = sadd.s32 %s47, 1
    %p51 = scmp.eq.s32.totalorder %s13, 1
    %p52 = scmp.ne.s32.totalorder %s47, %s49
    %p53 = scmp.eq.s32.totalorder %s13, 0
    %p54 = por %p52, %p53
    %p55 = scmp.ne.s32.totalorder %s47, %s49
    %p56 = scmp.eq.s32.totalorder %s18, 1
    %p57 = por %p55, %p56
    %p58 = scmp.ne.s32.totalorder %s49, %s50
    %p59 = scmp.eq.s32.totalorder %s18, 0
    %p60 = por %p58, %p59
    %p61 = scmp.ne.s32.totalorder %s49, %s50
    %p62 = scmp.eq.s32.totalorder %s19, 1
    %p63 = por %p61, %p62
    %p65 = scmp.ne.s32.totalorder %s50, %s64
    %p66 = scmp.eq.s32.totalorder %s19, 0
    %p67 = por %p65, %p66
    %s69 = sadd.s32 %s68, 1
    %p72 = scmp.eq.s32.totalorder %s13, 1
    %p73 = scmp.ne.s32.totalorder %s68, %s70
    %p74 = scmp.eq.s32.totalorder %s13, 0
    %p75 = por %p73, %p74
    %p76 = scmp.ne.s32.totalorder %s68, %s70
    %p77 = scmp.eq.s32.totalorder %s18, 1
    %p78 = por %p76, %p77
    %p79 = scmp.ne.s32.totalorder %s70, %s71
    %p80 = scmp.eq.s32.totalorder %s18, 0
    %p81 = por %p79, %p80
    %p82 = scmp.ne.s32.totalorder %s70, %s71
    %p83 = scmp.eq.s32.totalorder %s19, 1
    %p84 = por %p82, %p83
    %p86 = scmp.ne.s32.totalorder %s71, %s85
    %p87 = scmp.eq.s32.totalorder %s19, 0
    %p88 = por %p86, %p87
    %s90 = sadd.s32 %s89, 1
    %p93 = scmp.eq.s32.totalorder %s13, 1
    %p94 = scmp.ne.s32.totalorder %s89, %s91
    %p95 = scmp.eq.s32.totalorder %s13, 0
    %p96 = por %p94, %p95
    %p97 = scmp.ne.s32.totalorder %s89, %s91
    %p98 = scmp.eq.s32.totalorder %s18, 1
    %p99 = por %p97, %p98
    %p100 = scmp.ne.s32.totalorder %s91, %s92
    %p101 = scmp.eq.s32.totalorder %s18, 0
    %p102 = por %p100, %p101
    %p103 = scmp.ne.s32.totalorder %s91, %s92
    %p104 = scmp.eq.s32.totalorder %s19, 1
    %p105 = por %p103, %p104
    %p107 = scmp.ne.s32.totalorder %s92, %s106
    %p108 = scmp.eq.s32.totalorder %s19, 0
    %p109 = por %p107, %p108
    %s110 = ssub.s32 %s13, %s20
    %p111 = scmp.eq.s32.totalorder %s110, 0
    %s113 = sadd.s32 %s112, 1
    %s114 = scalar_select %p111, %s112, %s113
    %p117 = pneg %p111
    %p118 = scmp.eq.s32.totalorder %s13, 1
    %p119 = por %p117, %p118
    %p120 = scmp.ne.s32.totalorder %s112, %s115
    %p121 = scmp.eq.s32.totalorder %s13, 0
    %p122 = por %p120, %p121
    %p123 = scmp.ne.s32.totalorder %s112, %s115
    %p124 = scmp.eq.s32.totalorder %s18, 1
    %p125 = por %p123, %p124
    %p126 = scmp.ne.s32.totalorder %s115, %s116
    %p127 = scmp.eq.s32.totalorder %s18, 0
    %p128 = por %p126, %p127
    %p129 = scmp.ne.s32.totalorder %s115, %s116
    %p130 = scmp.eq.s32.totalorder %s19, 1
    %p131 = por %p129, %p130
    %p133 = scmp.ne.s32.totalorder %s116, %s132
    %p134 = scmp.eq.s32.totalorder %s19, 0
    %p135 = por %p133, %p134
    %s136 = ssub.s32 %s13, %s20
    %p137 = scmp.eq.s32.totalorder %s136, 0
    %s139 = sadd.s32 %s138, 1
    %s140 = scalar_select %p137, %s138, %s139
    %p143 = pneg %p137
    %p144 = scmp.eq.s32.totalorder %s13, 1
    %p145 = por %p143, %p144
    %p146 = scmp.ne.s32.totalorder %s138, %s141
    %p147 = scmp.eq.s32.totalorder %s13, 0
    %p148 = por %p146, %p147
    %p149 = scmp.ne.s32.totalorder %s138, %s141
    %p150 = scmp.eq.s32.totalorder %s18, 1
    %p151 = por %p149, %p150
    %p152 = scmp.ne.s32.totalorder %s141, %s142
    %p153 = scmp.eq.s32.totalorder %s18, 0
    %p154 = por %p152, %p153
    %p155 = scmp.ne.s32.totalorder %s141, %s142
    %p156 = scmp.eq.s32.totalorder %s19, 1
    %p157 = por %p155, %p156
    %p159 = scmp.ne.s32.totalorder %s142, %s158
    %p160 = scmp.eq.s32.totalorder %s19, 0
    %p161 = por %p159, %p160
    %s162 = ssub.s32 %s13, %s20
    %p163 = scmp.eq.s32.totalorder %s162, 0
    %s165 = sadd.s32 %s164, 1
    %s166 = scalar_select %p163, %s164, %s165
    %p169 = pneg %p163
    %p170 = scmp.eq.s32.totalorder %s13, 1
    %p171 = por %p169, %p170
    %p172 = scmp.ne.s32.totalorder %s164, %s167
    %p173 = scmp.eq.s32.totalorder %s13, 0
    %p174 = por %p172, %p173
    %p175 = scmp.ne.s32.totalorder %s164, %s167
    %p176 = scmp.eq.s32.totalorder %s18, 1
    %p177 = por %p175, %p176
    %p178 = scmp.ne.s32.totalorder %s167, %s168
    %p179 = scmp.eq.s32.totalorder %s18, 0
    %p180 = por %p178, %p179
    %p181 = scmp.ne.s32.totalorder %s167, %s168
    %p182 = scmp.eq.s32.totalorder %s19, 1
    %p183 = por %p181, %p182
    %p185 = scmp.ne.s32.totalorder %s168, %s184
    %p186 = scmp.eq.s32.totalorder %s19, 0
    %p187 = por %p185, %p186
    %p188 = scmp.le.s32.totalorder 1, %s13
    %p189 = scmp.lt.s32.totalorder %s13, 3
    %p190 = pnand %p188, %p189
    %p191 = pneg %p190
    // Predicated region
    $region9: #{tpu_custom_call.1} parent=5 // pred_check
      _
    $region10: #{tpu_custom_call.1} parent=5 // pred_check_branch
      %193 = sbr.rel (%p190) target = $region12
    $region11: #{tpu_custom_call.1} parent=5 // pred_region
      %s194 = ssub.s32 %s13, 1
      // Predicated region
      $region13: #{tpu_custom_call.1} parent=11 // pred_check
        %p195 = pneg %p60
      $region14: #{tpu_custom_call.1} parent=11 // pred_check_branch
        %197 = sbr.rel (%p195) target = $region16
      $region15: #{tpu_custom_call.1} parent=11 // pred_region
        _
      $region16: #{tpu_custom_call.1} parent=11 // pred_fallthru
        _
      // Predicated region
      $region17: #{tpu_custom_call.1} parent=11 // pred_check
        %p198 = pneg %p81
      $region18: #{tpu_custom_call.1} parent=11 // pred_check_branch
        %200 = sbr.rel (%p198) target = $region20
      $region19: #{tpu_custom_call.1} parent=11 // pred_region
        _
      $region20: #{tpu_custom_call.1} parent=11 // pred_fallthru
        _
      // Predicated region
      $region21: #{tpu_custom_call.1} parent=11 // pred_check
        %p201 = pneg %p102
      $region22: #{tpu_custom_call.1} parent=11 // pred_check_branch
        %203 = sbr.rel (%p201) target = $region24
      $region23: #{tpu_custom_call.1} parent=11 // pred_region
        _
      $region24: #{tpu_custom_call.1} parent=11 // pred_fallthru
        _
    $region12: #{tpu_custom_call.1} parent=5 // pred_fallthru
      _
    %p204 = scmp.lt.s32.totalorder %s13, 2
    // Predicated region
    $region25: #{tpu_custom_call.1} parent=5 // pred_check
      %p205 = pneg %p204
    $region26: #{tpu_custom_call.1} parent=5 // pred_check_branch
      %207 = sbr.rel (%p205) target = $region28
    $region27: #{tpu_custom_call.1} parent=5 // pred_region
      // Predicated region
      $region29: #{tpu_custom_call.1} parent=27 // pred_check
        %p208 = pneg %p33
      $region30: #{tpu_custom_call.1} parent=27 // pred_check_branch
        %210 = sbr.rel (%p208) target = $region32
      $region31: #{tpu_custom_call.1} parent=27 // pred_region
        %s211 = smul.u32 16, %s13
        %p212 = scmp.lt.s32.totalorder %s211, 31
        %s213 = scalar_select %p212, %s211, 31
        %s214 = smul.addr %s213, 4
        %s215 = scalar_lea.vmem %s0, %s214
        %s216 = smul.u32 16, %s13
      $region32: #{tpu_custom_call.1} parent=27 // pred_fallthru
        _
    $region28: #{tpu_custom_call.1} parent=5 // pred_fallthru
      _
    %p217 = scmp.le.s32.totalorder 1, %s13
    %p218 = scmp.lt.s32.totalorder %s13, 3
    %p219 = pnand %p217, %p218
    %p220 = pneg %p219
    // Predicated region
    $region33: #{tpu_custom_call.1} parent=5 // pred_check
      _
    $region34: #{tpu_custom_call.1} parent=5 // pred_check_branch
      %222 = sbr.rel (%p219) target = $region36
    $region35: #{tpu_custom_call.1} parent=5 // pred_region
      %s223 = ssub.s32 %s13, 1
      %s224 = smul.u32 16, %s18
      %p225 = scmp.lt.s32.totalorder %s224, 31
      %s226 = scalar_select %p225, %s224, 31
      %s227 = smul.addr %s226, 4
      %s228 = scalar_lea.vmem %s0, %s227
      %p229 = pneg %p39
      %p230 = pneg %p36
      %p231 = pneg %p60
      %p232 = pneg %p57
      %p233 = pneg %p81
      %p234 = pneg %p78
      %p235 = pneg %p102
      %p236 = pneg %p99
      %p237 = pneg %p128
      %p238 = pneg %p125
      %s239 = smul.u32 16, %s18
      %p240 = scmp.lt.s32.totalorder %s239, 31
      %s241 = scalar_select %p240, %s239, 31
      %s242 = smul.addr %s241, 4
      %s243 = scalar_lea.vmem %s4, %s242
      %p244 = pneg %p154
      %p245 = pneg %p151
      %s246 = smul.u32 16, %s18
      %p247 = scmp.lt.s32.totalorder %s246, 31
      %s248 = scalar_select %p247, %s246, 31
      %s249 = smul.addr %s248, 8
      %s250 = scalar_lea.vmem %s5, %s249
      %p251 = pneg %p180
      %p252 = pneg %p177
      %s253 = smul.u32 16, %s18
      %p254 = scmp.lt.s32.totalorder %s253, 31
      %s255 = scalar_select %p254, %s253, 31
      %s256 = smul.addr %s255, 8
      %s257 = scalar_lea.vmem %s6, %s256
      %s258 = smul.u32 16, %s18
      %p259 = scmp.lt.s32.totalorder %s258, 31
      %s260 = scalar_select %p259, %s258, 31
      %s261 = smul.addr %s260, 4
      %s262 = scalar_lea.vmem %s0, %s261
      %s263 = smul.u32 16, %s18
      %s264 = smul.u32 16, %s18
      %p265 = scmp.lt.s32.totalorder %s264, 31
      %s266 = scalar_select %p265, %s264, 31
      %s267 = smul.addr %s266, 4
      %s268 = scalar_lea.vmem %s4, %s267
      %s269 = smul.u32 16, %s18
      %s270 = smul.u32 16, %s18
      %p271 = scmp.lt.s32.totalorder %s270, 31
      %s272 = scalar_select %p271, %s270, 31
      %s273 = smul.addr %s272, 8
      %s274 = scalar_lea.vmem %s5, %s273
      %s275 = smul.u32 16, %s18
      %s276 = smul.u32 16, %s18
      %p277 = scmp.lt.s32.totalorder %s276, 31
      %s278 = scalar_select %p277, %s276, 31
      %s279 = smul.addr %s278, 8
      %s280 = scalar_lea.vmem %s6, %s279
      %s281 = smul.u32 16, %s18
      %v283 = vld [vmem:[%s262] sm:$0xf]
      %v284 = vld [vmem:[%s262 + $0x4] sm:$0xf]
      %v285 = vld [vmem:[%s262 + $0x8] sm:$0xf]
      %v286 = vld [vmem:[%s262 + $0xc] sm:$0xf]
      %v287 = vld [vmem:[%s262 + $0x10] sm:$0xf]
      %v288 = vld [vmem:[%s262 + $0x14] sm:$0xf]
      %v289 = vld [vmem:[%s262 + $0x18] sm:$0xf]
      %v290 = vld [vmem:[%s262 + $0x1c] sm:$0xf]
      %v291 = vld [vmem:[%s262 + $0x20] sm:$0xf]
      %v292 = vld [vmem:[%s262 + $0x24] sm:$0xf]
      %v293 = vld [vmem:[%s262 + $0x28] sm:$0xf]
      %v294 = vld [vmem:[%s262 + $0x2c] sm:$0xf]
      %v295 = vld [vmem:[%s262 + $0x30] sm:$0xf]
      %v296 = vld [vmem:[%s262 + $0x34] sm:$0xf]
      %v297 = vld [vmem:[%s262 + $0x38] sm:$0xf]
      %v298 = vld [vmem:[%s262 + $0x3c] sm:$0xf]
      %v299 = vld [vmem:[%s1] sm:$0xf]
      %v300 = vld [vmem:[%s1 + $0x4] sm:$0xf]
      %v301 = vld [vmem:[%s1 + $0x8] sm:$0xf]
      %v302 = vld [vmem:[%s1 + $0xc] sm:$0xf]
      %v319 = vunpack.c.l.b16 %v283
      %v320 = vunpack.c.l.b16 %v284
      %v321 = vunpack.c.l.b16 %v285
      %v322 = vunpack.c.l.b16 %v286
      %v323 = vunpack.c.l.b16 %v287
      %v324 = vunpack.c.l.b16 %v288
      %v325 = vunpack.c.l.b16 %v289
      %v326 = vunpack.c.l.b16 %v290
      %v327 = vunpack.c.l.b16 %v291
      %v328 = vunpack.c.l.b16 %v292
      %v329 = vunpack.c.l.b16 %v293
      %v330 = vunpack.c.l.b16 %v294
      %v331 = vunpack.c.l.b16 %v295
      %v332 = vunpack.c.l.b16 %v296
      %v333 = vunpack.c.l.b16 %v297
      %v334 = vunpack.c.l.b16 %v298
      %v335 = vpack.c.b16 %v320, %v319
      %v336 = vpack.c.b16 %v322, %v321
      %v337 = vpack.c.b16 %v324, %v323
      %v338 = vpack.c.b16 %v326, %v325
      %v339 = vpack.c.b16 %v328, %v327
      %v340 = vpack.c.b16 %v330, %v329
      %v341 = vpack.c.b16 %v332, %v331
      %v342 = vpack.c.b16 %v334, %v333
      %v347 = vunpack.c.l.b16 %v299
      %v348 = vunpack.c.l.b16 %v300
      %v349 = vunpack.c.l.b16 %v301
      %v350 = vunpack.c.l.b16 %v302
      %v351 = vpack.c.b16 %v348, %v347
      %v352 = vpack.c.b16 %v350, %v349
      %vm355 = vcmask 261120
      %v357 = vsel %vm355, %v335, 0
      %v360 = vsel %vm355, %v336, 0
      %v363 = vsel %vm355, %v337, 0
      %v366 = vsel %vm355, %v338, 0
      %v369 = vsel %vm355, %v339, 0
      %v372 = vsel %vm355, %v340, 0
      %v375 = vsel %vm355, %v341, 0
      %v378 = vsel %vm355, %v342, 0
      %380 = vmatpush.bf16.msra.mxu0 0
      %381 = vmatpush.bf16.msra.mxu0 0
      %382 = vmatpush.bf16.msra.mxu0 0
      %383 = vmatpush.bf16.msra.mxu0 0
      %384 = vmatpush.bf16.msra.mxu0 0
      %385 = vmatpush.bf16.msra.mxu0 0
      %386 = vmatpush.bf16.msra.mxu0 %v352
      %387 = vmatpush.bf16.msra.mxu0 %v351
      %388 = vmatmul.bf16.gmra.mxu0 %v357
      %v389 = vpop.f32.mrf.mxu0
      %v390 = vadd.f32 0.0, %v389
      %v391 = vpop.f32.mrf.mxu0
      %v392 = vadd.f32 0.0, %v391
      %393 = vmatmul.bf16.gmra.mxu0 %v360
      %v394 = vpop.f32.mrf.mxu0
      %v395 = vadd.f32 0.0, %v394
      %v396 = vpop.f32.mrf.mxu0
      %v397 = vadd.f32 0.0, %v396
      %398 = vmatmul.bf16.gmra.mxu0 %v363
      %v399 = vpop.f32.mrf.mxu0
      %v400 = vadd.f32 0.0, %v399
      %v401 = vpop.f32.mrf.mxu0
      %v402 = vadd.f32 0.0, %v401
      %403 = vmatmul.bf16.gmra.mxu0 %v366
      %v404 = vpop.f32.mrf.mxu0
      %v405 = vadd.f32 0.0, %v404
      %v406 = vpop.f32.mrf.mxu0
      %v407 = vadd.f32 0.0, %v406
      %408 = vmatmul.bf16.gmra.mxu0 %v369
      %v409 = vpop.f32.mrf.mxu0
      %v410 = vadd.f32 0.0, %v409
      %v411 = vpop.f32.mrf.mxu0
      %v412 = vadd.f32 0.0, %v411
      %413 = vmatmul.bf16.gmra.mxu0 %v372
      %v414 = vpop.f32.mrf.mxu0
      %v415 = vadd.f32 0.0, %v414
      %v416 = vpop.f32.mrf.mxu0
      %v417 = vadd.f32 0.0, %v416
      %418 = vmatmul.bf16.gmra.mxu0 %v375
      %v419 = vpop.f32.mrf.mxu0
      %v420 = vadd.f32 0.0, %v419
      %v421 = vpop.f32.mrf.mxu0
      %v422 = vadd.f32 0.0, %v421
      %423 = vmatmul.bf16.gmra.mxu0 %v378
      %v424 = vpop.f32.mrf.mxu0
      %v425 = vadd.f32 0.0, %v424
      %v426 = vpop.f32.mrf.mxu0
      %v427 = vadd.f32 0.0, %v426
      %428 = vdwg.mxu0
      %v429 = vpack.c.bf16 %v390, %v390
      %v430 = vpack.c.bf16 %v392, %v392
      %v431 = vpack.c.bf16 %v395, %v395
      %v432 = vpack.c.bf16 %v397, %v397
      %v433 = vpack.c.bf16 %v400, %v400
      %v434 = vpack.c.bf16 %v402, %v402
      %v435 = vpack.c.bf16 %v405, %v405
      %v436 = vpack.c.bf16 %v407, %v407
      %v437 = vpack.c.bf16 %v410, %v410
      %v438 = vpack.c.bf16 %v412, %v412
      %v439 = vpack.c.bf16 %v415, %v415
      %v440 = vpack.c.bf16 %v417, %v417
      %v441 = vpack.c.bf16 %v420, %v420
      %v442 = vpack.c.bf16 %v422, %v422
      %v443 = vpack.c.bf16 %v425, %v425
      %v444 = vpack.c.bf16 %v427, %v427
      %vm445 = vcmask 257024
      %446 = vst.msk [vmem:[%s268] sm:$0xf] %vm445, %v429
      %447 = vst.msk [vmem:[%s268 + $0x4] sm:$0xf] %vm445, %v430
      %448 = vst.msk [vmem:[%s268 + $0x8] sm:$0xf] %vm445, %v431
      %449 = vst.msk [vmem:[%s268 + $0xc] sm:$0xf] %vm445, %v432
      %450 = vst.msk [vmem:[%s268 + $0x10] sm:$0xf] %vm445, %v433
      %451 = vst.msk [vmem:[%s268 + $0x14] sm:$0xf] %vm445, %v434
      %452 = vst.msk [vmem:[%s268 + $0x18] sm:$0xf] %vm445, %v435
      %453 = vst.msk [vmem:[%s268 + $0x1c] sm:$0xf] %vm445, %v436
      %454 = vst.msk [vmem:[%s268 + $0x20] sm:$0xf] %vm445, %v437
      %455 = vst.msk [vmem:[%s268 + $0x24] sm:$0xf] %vm445, %v438
      %456 = vst.msk [vmem:[%s268 + $0x28] sm:$0xf] %vm445, %v439
      %457 = vst.msk [vmem:[%s268 + $0x2c] sm:$0xf] %vm445, %v440
      %458 = vst.msk [vmem:[%s268 + $0x30] sm:$0xf] %vm445, %v441
      %459 = vst.msk [vmem:[%s268 + $0x34] sm:$0xf] %vm445, %v442
      %460 = vst.msk [vmem:[%s268 + $0x38] sm:$0xf] %vm445, %v443
      %461 = vst.msk [vmem:[%s268 + $0x3c] sm:$0xf] %vm445, %v444
      %v462 = vld [vmem:[%s2] sm:$0xf]
      %v463 = vld [vmem:[%s2 + $0x4] sm:$0xf]
      %v464 = vld [vmem:[%s2 + $0x8] sm:$0xf]
      %v465 = vld [vmem:[%s2 + $0xc] sm:$0xf]
      %v482 = vunpack.c.l.b16 %v429
      %v483 = vunpack.c.l.b16 %v430
      %v484 = vunpack.c.l.b16 %v431
      %v485 = vunpack.c.l.b16 %v432
      %v486 = vunpack.c.l.b16 %v433
      %v487 = vunpack.c.l.b16 %v434
      %v488 = vunpack.c.l.b16 %v435
      %v489 = vunpack.c.l.b16 %v436
      %v490 = vunpack.c.l.b16 %v437
      %v491 = vunpack.c.l.b16 %v438
      %v492 = vunpack.c.l.b16 %v439
      %v493 = vunpack.c.l.b16 %v440
      %v494 = vunpack.c.l.b16 %v441
      %v495 = vunpack.c.l.b16 %v442
      %v496 = vunpack.c.l.b16 %v443
      %v497 = vunpack.c.l.b16 %v444
      %v498 = vpack.c.b16 %v483, %v482
      %v499 = vpack.c.b16 %v485, %v484
      %v500 = vpack.c.b16 %v487, %v486
      %v501 = vpack.c.b16 %v489, %v488
      %v502 = vpack.c.b16 %v491, %v490
      %v503 = vpack.c.b16 %v493, %v492
      %v504 = vpack.c.b16 %v495, %v494
      %v505 = vpack.c.b16 %v497, %v496
      %v510 = vunpack.c.l.b16 %v462
      %v511 = vunpack.c.l.b16 %v463
      %v512 = vunpack.c.l.b16 %v464
      %v513 = vunpack.c.l.b16 %v465
      %v514 = vpack.c.b16 %v511, %v510
      %v515 = vpack.c.b16 %v513, %v512
      %v519 = vsel %vm355, %v498, 0
      %v522 = vsel %vm355, %v499, 0
      %v525 = vsel %vm355, %v500, 0
      %v528 = vsel %vm355, %v501, 0
      %v531 = vsel %vm355, %v502, 0
      %v534 = vsel %vm355, %v503, 0
      %v537 = vsel %vm355, %v504, 0
      %v540 = vsel %vm355, %v505, 0
      %542 = vmatpush.bf16.msra.mxu0 0
      %543 = vmatpush.bf16.msra.mxu0 0
      %544 = vmatpush.bf16.msra.mxu0 0
      %545 = vmatpush.bf16.msra.mxu0 0
      %546 = vmatpush.bf16.msra.mxu0 0
      %547 = vmatpush.bf16.msra.mxu0 0
      %548 = vmatpush.bf16.msra.mxu0 %v515
      %549 = vmatpush.bf16.msra.mxu0 %v514
      %550 = vmatmul.bf16.gmra.mxu0 %v519
      %v551 = vpop.f32.mrf.mxu0
      %v552 = vadd.f32 0.0, %v551
      %v553 = vpop.f32.mrf.mxu0
      %v554 = vadd.f32 0.0, %v553
      %555 = vmatmul.bf16.gmra.mxu0 %v522
      %v556 = vpop.f32.mrf.mxu0
      %v557 = vadd.f32 0.0, %v556
      %v558 = vpop.f32.mrf.mxu0
      %v559 = vadd.f32 0.0, %v558
      %560 = vmatmul.bf16.gmra.mxu0 %v525
      %v561 = vpop.f32.mrf.mxu0
      %v562 = vadd.f32 0.0, %v561
      %v563 = vpop.f32.mrf.mxu0
      %v564 = vadd.f32 0.0, %v563
      %565 = vmatmul.bf16.gmra.mxu0 %v528
      %v566 = vpop.f32.mrf.mxu0
      %v567 = vadd.f32 0.0, %v566
      %v568 = vpop.f32.mrf.mxu0
      %v569 = vadd.f32 0.0, %v568
      %570 = vmatmul.bf16.gmra.mxu0 %v531
      %v571 = vpop.f32.mrf.mxu0
      %v572 = vadd.f32 0.0, %v571
      %v573 = vpop.f32.mrf.mxu0
      %v574 = vadd.f32 0.0, %v573
      %575 = vmatmul.bf16.gmra.mxu0 %v534
      %v576 = vpop.f32.mrf.mxu0
      %v577 = vadd.f32 0.0, %v576
      %v578 = vpop.f32.mrf.mxu0
      %v579 = vadd.f32 0.0, %v578
      %580 = vmatmul.bf16.gmra.mxu0 %v537
      %v581 = vpop.f32.mrf.mxu0
      %v582 = vadd.f32 0.0, %v581
      %v583 = vpop.f32.mrf.mxu0
      %v584 = vadd.f32 0.0, %v583
      %585 = vmatmul.bf16.gmra.mxu0 %v540
      %v586 = vpop.f32.mrf.mxu0
      %v587 = vadd.f32 0.0, %v586
      %v588 = vpop.f32.mrf.mxu0
      %v589 = vadd.f32 0.0, %v588
      %590 = vdwg.mxu0
      %vm591 = vcmask 15360
      %592 = vst.msk [vmem:[%s274] sm:$0xff] %vm591, %v552
      %593 = vst.msk [vmem:[%s274 + $0x8] sm:$0xff] %vm591, %v554
      %594 = vst.msk [vmem:[%s274 + $0x10] sm:$0xff] %vm591, %v557
      %595 = vst.msk [vmem:[%s274 + $0x18] sm:$0xff] %vm591, %v559
      %596 = vst.msk [vmem:[%s274 + $0x20] sm:$0xff] %vm591, %v562
      %597 = vst.msk [vmem:[%s274 + $0x28] sm:$0xff] %vm591, %v564
      %598 = vst.msk [vmem:[%s274 + $0x30] sm:$0xff] %vm591, %v567
      %599 = vst.msk [vmem:[%s274 + $0x38] sm:$0xff] %vm591, %v569
      %600 = vst.msk [vmem:[%s274 + $0x40] sm:$0xff] %vm591, %v572
      %601 = vst.msk [vmem:[%s274 + $0x48] sm:$0xff] %vm591, %v574
      %602 = vst.msk [vmem:[%s274 + $0x50] sm:$0xff] %vm591, %v577
      %603 = vst.msk [vmem:[%s274 + $0x58] sm:$0xff] %vm591, %v579
      %604 = vst.msk [vmem:[%s274 + $0x60] sm:$0xff] %vm591, %v582
      %605 = vst.msk [vmem:[%s274 + $0x68] sm:$0xff] %vm591, %v584
      %606 = vst.msk [vmem:[%s274 + $0x70] sm:$0xff] %vm591, %v587
      %607 = vst.msk [vmem:[%s274 + $0x78] sm:$0xff] %vm591, %v589
      %v608 = vld [vmem:[%s3] sm:$0xf]
      %v609 = vld [vmem:[%s3 + $0x4] sm:$0xf]
      %v610 = vld [vmem:[%s3 + $0x8] sm:$0xf]
      %v611 = vld [vmem:[%s3 + $0xc] sm:$0xf]
      %v616 = vunpack.c.l.b16 %v608
      %v617 = vunpack.c.l.b16 %v609
      %v618 = vunpack.c.l.b16 %v610
      %v619 = vunpack.c.l.b16 %v611
      %v620 = vpack.c.b16 %v617, %v616
      %v621 = vpack.c.b16 %v619, %v618
      %624 = vmatpush.bf16.msra.mxu0 0
      %625 = vmatpush.bf16.msra.mxu0 0
      %626 = vmatpush.bf16.msra.mxu0 0
      %627 = vmatpush.bf16.msra.mxu0 0
      %628 = vmatpush.bf16.msra.mxu0 0
      %629 = vmatpush.bf16.msra.mxu0 0
      %630 = vmatpush.bf16.msra.mxu0 %v621
      %631 = vmatpush.bf16.msra.mxu0 %v620
      %632 = vmatmul.bf16.gmra.mxu0 %v519
      %v633 = vpop.f32.mrf.mxu0
      %v634 = vadd.f32 0.0, %v633
      %v635 = vpop.f32.mrf.mxu0
      %v636 = vadd.f32 0.0, %v635
      %637 = vmatmul.bf16.gmra.mxu0 %v522
      %v638 = vpop.f32.mrf.mxu0
      %v639 = vadd.f32 0.0, %v638
      %v640 = vpop.f32.mrf.mxu0
      %v641 = vadd.f32 0.0, %v640
      %642 = vmatmul.bf16.gmra.mxu0 %v525
      %v643 = vpop.f32.mrf.mxu0
      %v644 = vadd.f32 0.0, %v643
      %v645 = vpop.f32.mrf.mxu0
      %v646 = vadd.f32 0.0, %v645
      %647 = vmatmul.bf16.gmra.mxu0 %v528
      %v648 = vpop.f32.mrf.mxu0
      %v649 = vadd.f32 0.0, %v648
      %v650 = vpop.f32.mrf.mxu0
      %v651 = vadd.f32 0.0, %v650
      %652 = vmatmul.bf16.gmra.mxu0 %v531
      %v653 = vpop.f32.mrf.mxu0
      %v654 = vadd.f32 0.0, %v653
      %v655 = vpop.f32.mrf.mxu0
      %v656 = vadd.f32 0.0, %v655
      %657 = vmatmul.bf16.gmra.mxu0 %v534
      %v658 = vpop.f32.mrf.mxu0
      %v659 = vadd.f32 0.0, %v658
      %v660 = vpop.f32.mrf.mxu0
      %v661 = vadd.f32 0.0, %v660
      %662 = vmatmul.bf16.gmra.mxu0 %v537
      %v663 = vpop.f32.mrf.mxu0
      %v664 = vadd.f32 0.0, %v663
      %v665 = vpop.f32.mrf.mxu0
      %v666 = vadd.f32 0.0, %v665
      %667 = vmatmul.bf16.gmra.mxu0 %v540
      %v668 = vpop.f32.mrf.mxu0
      %v669 = vadd.f32 0.0, %v668
      %v670 = vpop.f32.mrf.mxu0
      %v671 = vadd.f32 0.0, %v670
      %672 = vdwg.mxu0
      %673 = vst.msk [vmem:[%s280] sm:$0xff] %vm591, %v634
      %674 = vst.msk [vmem:[%s280 + $0x8] sm:$0xff] %vm591, %v636
      %675 = vst.msk [vmem:[%s280 + $0x10] sm:$0xff] %vm591, %v639
      %676 = vst.msk [vmem:[%s280 + $0x18] sm:$0xff] %vm591, %v641
      %677 = vst.msk [vmem:[%s280 + $0x20] sm:$0xff] %vm591, %v644
      %678 = vst.msk [vmem:[%s280 + $0x28] sm:$0xff] %vm591, %v646
      %679 = vst.msk [vmem:[%s280 + $0x30] sm:$0xff] %vm591, %v649
      %680 = vst.msk [vmem:[%s280 + $0x38] sm:$0xff] %vm591, %v651
      %681 = vst.msk [vmem:[%s280 + $0x40] sm:$0xff] %vm591, %v654
      %682 = vst.msk [vmem:[%s280 + $0x48] sm:$0xff] %vm591, %v656
      %683 = vst.msk [vmem:[%s280 + $0x50] sm:$0xff] %vm591, %v659
      %684 = vst.msk [vmem:[%s280 + $0x58] sm:$0xff] %vm591, %v661
      %685 = vst.msk [vmem:[%s280 + $0x60] sm:$0xff] %vm591, %v664
      %686 = vst.msk [vmem:[%s280 + $0x68] sm:$0xff] %vm591, %v666
      %687 = vst.msk [vmem:[%s280 + $0x70] sm:$0xff] %vm591, %v669
      %688 = vst.msk [vmem:[%s280 + $0x78] sm:$0xff] %vm591, %v671
      %s689 = smul.u32 16, %s18
      %p690 = scmp.lt.s32.totalorder %s689, 31
      %s691 = scalar_select %p690, %s689, 31
      %s692 = smul.addr %s691, 4
      %s693 = scalar_lea.vmem %s4, %s692
      %s694 = smul.u32 16, %s18
      %p695 = scmp.lt.s32.totalorder %s694, 31
      %s696 = scalar_select %p695, %s694, 31
      %s697 = smul.addr %s696, 8
      %s698 = scalar_lea.vmem %s5, %s697
      %s699 = smul.u32 16, %s18
      %p700 = scmp.lt.s32.totalorder %s699, 31
      %s701 = scalar_select %p700, %s699, 31
      %s702 = smul.addr %s701, 8
      %s703 = scalar_lea.vmem %s6, %s702
      // Predicated region
      $region37: #{tpu_custom_call.1} parent=35 // pred_check
        %p704 = pneg %p125
      $region38: #{tpu_custom_call.1} parent=35 // pred_check_branch
        %706 = sbr.rel (%p704) target = $region40
      $region39: #{tpu_custom_call.1} parent=35 // pred_region
        %s707 = smul.u32 16, %s18
      $region40: #{tpu_custom_call.1} parent=35 // pred_fallthru
        _
      // Predicated region
      $region41: #{tpu_custom_call.1} parent=35 // pred_check
        %p708 = pneg %p151
      $region42: #{tpu_custom_call.1} parent=35 // pred_check_branch
        %710 = sbr.rel (%p708) target = $region44
      $region43: #{tpu_custom_call.1} parent=35 // pred_region
        %s711 = smul.u32 16, %s18
      $region44: #{tpu_custom_call.1} parent=35 // pred_fallthru
        _
      // Predicated region
      $region45: #{tpu_custom_call.1} parent=35 // pred_check
        %p712 = pneg %p177
      $region46: #{tpu_custom_call.1} parent=35 // pred_check_branch
        %714 = sbr.rel (%p712) target = $region48
      $region47: #{tpu_custom_call.1} parent=35 // pred_region
        %s715 = smul.u32 16, %s18
      $region48: #{tpu_custom_call.1} parent=35 // pred_fallthru
        _
    $region36: #{tpu_custom_call.1} parent=5 // pred_fallthru
      _
    %p716 = scmp.le.s32.totalorder 2, %s13
    // Predicated region
    $region49: #{tpu_custom_call.1} parent=5 // pred_check
      %p717 = pneg %p716
    $region50: #{tpu_custom_call.1} parent=5 // pred_check_branch
      %719 = sbr.rel (%p717) target = $region52
    $region51: #{tpu_custom_call.1} parent=5 // pred_region
      %s720 = ssub.s32 %s13, 2
      // Predicated region
      $region53: #{tpu_custom_call.1} parent=51 // pred_check
        %p721 = pneg %p131
      $region54: #{tpu_custom_call.1} parent=51 // pred_check_branch
        %723 = sbr.rel (%p721) target = $region56
      $region55: #{tpu_custom_call.1} parent=51 // pred_region
        %s724 = smul.u32 16, %s19
        %p725 = scmp.lt.s32.totalorder %s724, 31
        %s726 = scalar_select %p725, %s724, 31
        %s727 = smul.addr %s726, 4
        %s728 = scalar_lea.vmem %s4, %s727
      $region56: #{tpu_custom_call.1} parent=51 // pred_fallthru
        _
      // Predicated region
      $region57: #{tpu_custom_call.1} parent=51 // pred_check
        %p729 = pneg %p157
      $region58: #{tpu_custom_call.1} parent=51 // pred_check_branch
        %731 = sbr.rel (%p729) target = $region60
      $region59: #{tpu_custom_call.1} parent=51 // pred_region
        %s732 = smul.u32 16, %s19
        %p733 = scmp.lt.s32.totalorder %s732, 31
        %s734 = scalar_select %p733, %s732, 31
        %s735 = smul.addr %s734, 8
        %s736 = scalar_lea.vmem %s5, %s735
      $region60: #{tpu_custom_call.1} parent=51 // pred_fallthru
        _
      // Predicated region
      $region61: #{tpu_custom_call.1} parent=51 // pred_check
        %p737 = pneg %p183
      $region62: #{tpu_custom_call.1} parent=51 // pred_check_branch
        %739 = sbr.rel (%p737) target = $region64
      $region63: #{tpu_custom_call.1} parent=51 // pred_region
        %s740 = smul.u32 16, %s19
        %p741 = scmp.lt.s32.totalorder %s740, 31
        %s742 = scalar_select %p741, %s740, 31
        %s743 = smul.addr %s742, 8
        %s744 = scalar_lea.vmem %s6, %s743
      $region64: #{tpu_custom_call.1} parent=51 // pred_fallthru
        _
    $region52: #{tpu_custom_call.1} parent=5 // pred_fallthru
      _
  $region6: #{tpu_custom_call.1} parent=0 // loop_footer
    %s17 = sadd.s32 1, %s13
  $region7: #{tpu_custom_call.1} parent=0 // loop_footer_branch
    %12 = sbr.rel target = $region3
  $region8: #{tpu_custom_call.1} parent=0 // loop_exit
    _

</llo_original>
